<compile_context>
chip_gen: v6e
topology: v6e:2x2x1
jax: 0.10.0
libtpu: 0.0.40
codegen_flags: <defaults>
</compile_context>

<pallas_src>
import functools

import jax
import jax.numpy as jnp
from jax import lax
from jax.experimental import pallas as pl
from jax.experimental.pallas import tpu as pltpu

LANES = 128   # TPU lane width
H1 = 256      # feature_extractor hidden
H2 = 128      # feature width
HEAD = 64     # per-head hidden


def _actor_critic_kernel(x_ref, w1_ref, w2_ref, wh1_ref, wh2_ref, bias_ref, out_ref,
                         *, n_continuous):
    nc = n_continuous
    f32 = jnp.float32
    bf16 = jnp.bfloat16

    # Bias slab (f32): row0 = b1 (256), row1 = concatenated head layer-1 biases (256),
    #                  row2 = [b2 (128) | packed head layer-2 biases (128)]
    b1 = bias_ref[0, :]             # (256,)
    bh1 = bias_ref[1, :]            # (256,)
    b2 = bias_ref[2, 0:H2]          # (128,)
    bh2 = bias_ref[2, H2:2 * H2]    # (128,)

    # bf16 operands, f32 accumulation on the MXU; everything elementwise stays f32.
    x = x_ref[...].astype(bf16)                                                     # (TB, K_pad)
    h1 = jnp.maximum(jnp.dot(x, w1_ref[...], preferred_element_type=f32) + b1, 0.0)  # (TB, 256)
    feat = jnp.maximum(
        jnp.dot(h1.astype(bf16), w2_ref[...], preferred_element_type=f32) + b2, 0.0)  # (TB, 128)
    hh = jnp.maximum(
        jnp.dot(feat.astype(bf16), wh1_ref[...], preferred_element_type=f32) + bh1, 0.0)  # (TB, 256)
    z = jnp.dot(hh.astype(bf16), wh2_ref[...], preferred_element_type=f32) + bh2          # (TB, 128)
    # z lanes: [0:2]=logits  [2:2+nc]=mu_pre  [2+nc:2+2nc]=kappa_pre  [2+2nc]=value  rest=pad

    # Head nonlinearities evaluated once on the lane-dense f32 slab (EUP), lane-selected.
    t = 180.0 * jnp.tanh(z)
    s = jnp.maximum(z, 0.0) + jnp.log1p(jnp.exp(-jnp.abs(z))) + 0.1   # stable softplus + 0.1
    lane = lax.broadcasted_iota(jnp.int32, z.shape, 1)
    is_mu = (lane >= 2) & (lane < 2 + nc)
    is_kappa = (lane >= 2 + nc) & (lane < 2 + 2 * nc)
    out_ref[...] = jnp.where(is_mu, t, jnp.where(is_kappa, s, z))


def init_params(key, input_dim, n_continuous):
    """Mirrors set_init: W ~ N(0, 0.1) in PyTorch (out,in) layout, b = 0.
    Stored here as (in, out) weights and 1-D biases (float32)."""
    dims = {
        "1": (input_dim, 256), "2": (256, 128),
        "d1": (128, 64), "d2": (64, 2),
        "m1": (128, 64), "m2": (64, n_continuous),
        "k1": (128, 64), "k2": (64, n_continuous),
        "v1": (128, 64), "v2": (64, 1),
    }
    params = {}
    keys = jax.random.split(key, len(dims))
    for k_, (name, (din, dout)) in zip(keys, dims.items()):
        w_torch = 0.1 * jax.random.normal(k_, (dout, din), dtype=jnp.float32)  # nn.Linear weight
        params["w" + name] = w_torch.T                        # (din, dout) for x @ W
        params["b" + name] = jnp.zeros((dout,), jnp.float32)
    return params


def pack_params(p, input_dim, n_continuous):
    """Pack the 20 small weight/bias arrays into 4 bf16 weight slabs + 1 f32 bias slab.

    Call ONCE per parameter update (NOT per forward); the result is passed to
    actor_critic_forward."""
    nc = n_continuous
    k_pad = pl.cdiv(input_dim, LANES) * LANES

    # Layer-1 weight, zero-padded in K to the lane width.
    w1 = jnp.zeros((k_pad, H1), jnp.float32).at[:input_dim, :].set(p["w1"])

    # Fused head layer-1 weight: [d1 | m1 | k1 | v1] -> (128, 256)
    wh1 = jnp.concatenate([p["wd1"], p["wm1"], p["wk1"], p["wv1"]], axis=1)

    # Block-diagonal fused head layer-2 weight -> (256, 128), output lanes packed as
    # [0:2]=logits, [2:2+nc]=mu, [2+nc:2+2nc]=kappa, [2+2nc]=value.
    wh2 = jnp.zeros((4 * HEAD, H2), jnp.float32)
    wh2 = wh2.at[0 * HEAD:1 * HEAD, 0:2].set(p["wd2"])
    wh2 = wh2.at[1 * HEAD:2 * HEAD, 2:2 + nc].set(p["wm2"])
    wh2 = wh2.at[2 * HEAD:3 * HEAD, 2 + nc:2 + 2 * nc].set(p["wk2"])
    wh2 = wh2.at[3 * HEAD:4 * HEAD, 2 + 2 * nc:2 + 2 * nc + 1].set(p["wv2"])

    # Bias slab (f32): row0 = b1, row1 = concatenated head layer-1 biases,
    #                  row2 = [b2 | packed head layer-2 biases]
    bh1 = jnp.concatenate([p["bd1"], p["bm1"], p["bk1"], p["bv1"]])           # (256,)
    bh2 = jnp.zeros((H2,), jnp.float32)
    bh2 = bh2.at[0:2].set(p["bd2"])
    bh2 = bh2.at[2:2 + nc].set(p["bm2"])
    bh2 = bh2.at[2 + nc:2 + 2 * nc].set(p["bk2"])
    bh2 = bh2.at[2 + 2 * nc:2 + 2 * nc + 1].set(p["bv2"])
    bias = jnp.stack([p["b1"], bh1, jnp.concatenate([p["b2"], bh2])])         # (3, 256)

    return {
        "w1": w1.astype(jnp.bfloat16),         # (k_pad, 256)
        "w2": p["w2"].astype(jnp.bfloat16),    # (256, 128)
        "wh1": wh1.astype(jnp.bfloat16),       # (128, 256)
        "wh2": wh2.astype(jnp.bfloat16),       # (256, 128)
        "bias": bias,                          # (3, 256) f32
    }


@functools.partial(jax.jit, static_argnames=("n_continuous", "batch_tile"))
def actor_critic_forward(state, packed, *, n_continuous, batch_tile=None):
    # Mirror `if state.dim() == 1: state = state.unsqueeze(0)`
    if state.ndim == 1:
        state = state[None, :]
    B, in_dim = state.shape
    nc = n_continuous
    assert 2 + 2 * nc + 1 <= LANES, "output slab packs logits|mu|kappa|v into 128 lanes"
    k_pad = packed["w1"].shape[0]
    assert in_dim <= k_pad

    # Batch tile: multiple of 8 sublanes; 512 rows amortizes per-step overhead while the
    # resident weights keep VMEM usage tiny on all generations (incl. v7x 64 MiB).
    if batch_tile is None:
        tb = min(512, max(8, ((B + 7) // 8) * 8))
    else:
        tb = batch_tile
    b_pad = pl.cdiv(B, tb) * tb

    # Zero-pad batch to the tile and lanes to 128 (no bias-fold lane anymore).
    xp = jnp.pad(state.astype(jnp.float32), ((0, b_pad - B), (0, k_pad - in_dim)))

    kernel = functools.partial(_actor_critic_kernel, n_continuous=nc)

    def resident(shape):
        return pl.BlockSpec(shape, lambda i: (0, 0))   # weights stay in VMEM across the grid

    slab = pl.pallas_call(
        kernel,
        out_shape=jax.ShapeDtypeStruct((b_pad, LANES), jnp.float32),
        grid_spec=pltpu.PrefetchScalarGridSpec(
            num_scalar_prefetch=0,
            grid=(b_pad // tb,),
            in_specs=[
                pl.BlockSpec((tb, k_pad), lambda i: (i, 0)),
                resident(packed["w1"].shape),
                resident(packed["w2"].shape),
                resident(packed["wh1"].shape),
                resident(packed["wh2"].shape),
                resident(packed["bias"].shape),
            ],
            out_specs=pl.BlockSpec((tb, LANES), lambda i: (i, 0)),
        ),
        compiler_params=pltpu.CompilerParams(dimension_semantics=("parallel",)),
    )(xp, packed["w1"], packed["w2"], packed["wh1"], packed["wh2"], packed["bias"])

    logits = slab[:B, 0:2]
    mu = slab[:B, 2:2 + nc]
    kappa = slab[:B, 2 + nc:2 + 2 * nc]
    v = slab[:B, 2 + 2 * nc:2 + 2 * nc + 1]
    return logits, mu, kappa, v


def _reference_forward(state, p):
    """Pure-JAX f32 reference (unfused, unpacked params) for correctness checking."""
    if state.ndim == 1:
        state = state[None, :]
    relu = lambda z: jnp.maximum(z, 0.0)
    lin = lambda h, w, b: h @ w + b
    h = relu(lin(state, p["w1"], p["b1"]))
    feat = relu(lin(h, p["w2"], p["b2"]))
    logits = lin(relu(lin(feat, p["wd1"], p["bd1"])), p["wd2"], p["bd2"])
    mu = 180.0 * jnp.tanh(lin(relu(lin(feat, p["wm1"], p["bm1"])), p["wm2"], p["bm2"]))
    kappa = jax.nn.softplus(lin(relu(lin(feat, p["wk1"], p["bk1"])), p["wk2"], p["bk2"])) + 0.1
    v = lin(relu(lin(feat, p["wv1"], p["bv1"])), p["wv2"], p["bv2"])
    return logits, mu, kappa, v


if __name__ == "__main__":
    B = 8
    input_dim = 32
    n_discrete = 2      # forward() only uses this via the fixed 2-logit head
    n_continuous = 4

    key = jax.random.PRNGKey(0)
    pkey, skey, bkey = jax.random.split(key, 3)
    params = init_params(pkey, input_dim, n_continuous)

    # set_init zeros the biases; perturb them here so the self-test actually exercises
    # the packed bias paths (forward semantics are unchanged).
    bkeys = jax.random.split(bkey, 10)
    for bk, name in zip(bkeys, ["b1", "b2", "bd1", "bd2", "bm1", "bm2", "bk1", "bk2", "bv1", "bv2"]):
        params[name] = 0.05 * jax.random.normal(bk, params[name].shape, dtype=jnp.float32)

    state = jax.random.normal(skey, (B, input_dim), dtype=jnp.float32)

    # Pack once (per parameter update), then the jitted forward only runs the pallas_call.
    packed = pack_params(params, input_dim, n_continuous)
    outs = actor_critic_forward(state, packed, n_continuous=n_continuous)
    outs = jax.block_until_ready(outs)

    refs = _reference_forward(state, params)
    # bf16 MXU operands with f32 accumulation: loosened tolerances (mu is scaled by 180).
    tols = [
        dict(atol=5e-2, rtol=5e-2),   # logits
        dict(atol=1.0,  rtol=5e-2),   # mu (180 * tanh amplifies rounding)
        dict(atol=5e-2, rtol=5e-2),   # kappa
        dict(atol=5e-2, rtol=5e-2),   # values
    ]
    for o, r, tol in zip(outs, refs, tols):
        assert o.shape == r.shape and o.dtype == r.dtype
        assert jnp.allclose(o, r, **tol), (
            f"mismatch: max abs err {float(jnp.max(jnp.abs(o - r))):.4f}")

    print("KERNEL_OK")
</pallas_src>

<mosaic_0001>
module attributes {stable_mosaic.version = 11 : i64} {
  func.func @_actor_critic_kernel(%arg0: i32, %arg1: memref<8x128xf32, #tpu.memory_space<vmem>>, %arg2: memref<128x256xbf16, #tpu.memory_space<vmem>>, %arg3: memref<256x128xbf16, #tpu.memory_space<vmem>>, %arg4: memref<128x256xbf16, #tpu.memory_space<vmem>>, %arg5: memref<256x128xbf16, #tpu.memory_space<vmem>>, %arg6: memref<3x256xf32, #tpu.memory_space<vmem>>, %arg7: memref<8x128xf32, #tpu.memory_space<vmem>>) attributes {dimension_semantics = [#tpu.dimension_semantics<parallel>], iteration_bounds = array<i64: 1>, scalar_prefetch = 0 : i64, scratch_operands = 0 : i64, tpu.core_type = #tpu.core_type<tc>, window_params = [{transform_indices = @transform_0, window_bounds = array<i64: 8, 128>}, {pipeline_mode = #tpu.pipeline_mode<synchronous>, transform_indices = @transform_1, window_bounds = array<i64: 128, 256>}, {pipeline_mode = #tpu.pipeline_mode<synchronous>, transform_indices = @transform_2, window_bounds = array<i64: 256, 128>}, {pipeline_mode = #tpu.pipeline_mode<synchronous>, transform_indices = @transform_3, window_bounds = array<i64: 128, 256>}, {pipeline_mode = #tpu.pipeline_mode<synchronous>, transform_indices = @transform_4, window_bounds = array<i64: 256, 128>}, {pipeline_mode = #tpu.pipeline_mode<synchronous>, transform_indices = @transform_5, window_bounds = array<i64: 3, 256>}, {transform_indices = @transform_6, window_bounds = array<i64: 8, 128>}]} {
    %c0 = arith.constant 0 : index
    %c0_0 = arith.constant 0 : index
    %0 = vector.load %arg6[%c0, %c0_0] : memref<3x256xf32, #tpu.memory_space<vmem>>, vector<1x256xf32>
    %1 = vector.shape_cast %0 : vector<1x256xf32> to vector<256xf32>
    %c1 = arith.constant 1 : index
    %c0_1 = arith.constant 0 : index
    %2 = vector.load %arg6[%c1, %c0_1] : memref<3x256xf32, #tpu.memory_space<vmem>>, vector<1x256xf32>
    %3 = vector.shape_cast %2 : vector<1x256xf32> to vector<256xf32>
    %c2 = arith.constant 2 : index
    %c0_2 = arith.constant 0 : index
    %4 = vector.load %arg6[%c2, %c0_2] : memref<3x256xf32, #tpu.memory_space<vmem>>, vector<1x128xf32>
    %5 = vector.shape_cast %4 : vector<1x128xf32> to vector<128xf32>
    %c2_3 = arith.constant 2 : index
    %c128 = arith.constant 128 : index
    %6 = vector.load %arg6[%c2_3, %c128] : memref<3x256xf32, #tpu.memory_space<vmem>>, vector<1x128xf32>
    %7 = vector.shape_cast %6 : vector<1x128xf32> to vector<128xf32>
    %c0_4 = arith.constant 0 : index
    %c0_5 = arith.constant 0 : index
    %8 = vector.load %arg1[%c0_4, %c0_5] : memref<8x128xf32, #tpu.memory_space<vmem>>, vector<8x128xf32>
    %9 = arith.truncf %8 : vector<8x128xf32> to vector<8x128xbf16>
    %c0_6 = arith.constant 0 : index
    %c0_7 = arith.constant 0 : index
    %10 = vector.load %arg2[%c0_6, %c0_7] : memref<128x256xbf16, #tpu.memory_space<vmem>>, vector<128x256xbf16>
    %cst = arith.constant dense<0.000000e+00> : vector<8x256xf32>
    %11 = tpu.matmul %9, %10, %cst {dimension_numbers = #tpu.dot_dimension_numbers<[1], [0], [0], [1], [0, 0, 1, 1], [], []>} : vector<8x128xbf16>, vector<128x256xbf16>, vector<8x256xf32> -> vector<8x256xf32>
    %12 = vector.shape_cast %1 : vector<256xf32> to vector<1x256xf32>
    %13 = vector.broadcast %12 : vector<1x256xf32> to vector<8x256xf32>
    %14 = arith.addf %11, %13 : vector<8x256xf32>
    %cst_8 = arith.constant 0.000000e+00 : f32
    %15 = vector.broadcast %cst_8 : f32 to vector<8x256xf32>
    %16 = arith.maximumf %14, %15 : vector<8x256xf32>
    %17 = arith.truncf %16 : vector<8x256xf32> to vector<8x256xbf16>
    %c0_9 = arith.constant 0 : index
    %c0_10 = arith.constant 0 : index
    %18 = vector.load %arg3[%c0_9, %c0_10] : memref<256x128xbf16, #tpu.memory_space<vmem>>, vector<256x128xbf16>
    %cst_11 = arith.constant dense<0.000000e+00> : vector<8x128xf32>
    %19 = tpu.matmul %17, %18, %cst_11 {dimension_numbers = #tpu.dot_dimension_numbers<[1], [0], [0], [1], [0, 0, 1, 1], [], []>} : vector<8x256xbf16>, vector<256x128xbf16>, vector<8x128xf32> -> vector<8x128xf32>
    %20 = vector.shape_cast %5 : vector<128xf32> to vector<1x128xf32>
    %21 = vector.broadcast %20 : vector<1x128xf32> to vector<8x128xf32>
    %22 = arith.addf %19, %21 : vector<8x128xf32>
    %cst_12 = arith.constant 0.000000e+00 : f32
    %23 = vector.broadcast %cst_12 : f32 to vector<8x128xf32>
    %24 = arith.maximumf %22, %23 : vector<8x128xf32>
    %25 = arith.truncf %24 : vector<8x128xf32> to vector<8x128xbf16>
    %c0_13 = arith.constant 0 : index
    %c0_14 = arith.constant 0 : index
    %26 = vector.load %arg4[%c0_13, %c0_14] : memref<128x256xbf16, #tpu.memory_space<vmem>>, vector<128x256xbf16>
    %cst_15 = arith.constant dense<0.000000e+00> : vector<8x256xf32>
    %27 = tpu.matmul %25, %26, %cst_15 {dimension_numbers = #tpu.dot_dimension_numbers<[1], [0], [0], [1], [0, 0, 1, 1], [], []>} : vector<8x128xbf16>, vector<128x256xbf16>, vector<8x256xf32> -> vector<8x256xf32>
    %28 = vector.shape_cast %3 : vector<256xf32> to vector<1x256xf32>
    %29 = vector.broadcast %28 : vector<1x256xf32> to vector<8x256xf32>
    %30 = arith.addf %27, %29 : vector<8x256xf32>
    %cst_16 = arith.constant 0.000000e+00 : f32
    %31 = vector.broadcast %cst_16 : f32 to vector<8x256xf32>
    %32 = arith.maximumf %30, %31 : vector<8x256xf32>
    %33 = arith.truncf %32 : vector<8x256xf32> to vector<8x256xbf16>
    %c0_17 = arith.constant 0 : index
    %c0_18 = arith.constant 0 : index
    %34 = vector.load %arg5[%c0_17, %c0_18] : memref<256x128xbf16, #tpu.memory_space<vmem>>, vector<256x128xbf16>
    %cst_19 = arith.constant dense<0.000000e+00> : vector<8x128xf32>
    %35 = tpu.matmul %33, %34, %cst_19 {dimension_numbers = #tpu.dot_dimension_numbers<[1], [0], [0], [1], [0, 0, 1, 1], [], []>} : vector<8x256xbf16>, vector<256x128xbf16>, vector<8x128xf32> -> vector<8x128xf32>
    %36 = vector.shape_cast %7 : vector<128xf32> to vector<1x128xf32>
    %37 = vector.broadcast %36 : vector<1x128xf32> to vector<8x128xf32>
    %38 = arith.addf %35, %37 : vector<8x128xf32>
    %39 = math.tanh %38 : vector<8x128xf32>
    %cst_20 = arith.constant 1.800000e+02 : f32
    %40 = vector.broadcast %cst_20 : f32 to vector<8x128xf32>
    %41 = arith.mulf %40, %39 : vector<8x128xf32>
    %cst_21 = arith.constant 0.000000e+00 : f32
    %42 = vector.broadcast %cst_21 : f32 to vector<8x128xf32>
    %43 = arith.maximumf %38, %42 : vector<8x128xf32>
    %44 = math.absf %38 : vector<8x128xf32>
    %cst_22 = arith.constant 0.000000e+00 : f32
    %45 = vector.broadcast %cst_22 : f32 to vector<8x128xf32>
    %46 = arith.subf %45, %44 : vector<8x128xf32>
    %47 = math.exp %46 : vector<8x128xf32>
    %48 = math.log1p %47 : vector<8x128xf32>
    %49 = arith.addf %43, %48 : vector<8x128xf32>
    %cst_23 = arith.constant 1.000000e-01 : f32
    %50 = vector.broadcast %cst_23 : f32 to vector<8x128xf32>
    %51 = arith.addf %49, %50 : vector<8x128xf32>
    %52 = tpu.iota {dimensions = array<i32: 1>} : vector<8x128xi32>
    %c2_i32 = arith.constant 2 : i32
    %53 = vector.broadcast %c2_i32 : i32 to vector<8x128xi32>
    %54 = arith.cmpi sge, %52, %53 : vector<8x128xi32>
    %c6_i32 = arith.constant 6 : i32
    %55 = vector.broadcast %c6_i32 : i32 to vector<8x128xi32>
    %56 = arith.cmpi slt, %52, %55 : vector<8x128xi32>
    %57 = arith.andi %54, %56 : vector<8x128xi1>
    %c6_i32_24 = arith.constant 6 : i32
    %58 = vector.broadcast %c6_i32_24 : i32 to vector<8x128xi32>
    %59 = arith.cmpi sge, %52, %58 : vector<8x128xi32>
    %c10_i32 = arith.constant 10 : i32
    %60 = vector.broadcast %c10_i32 : i32 to vector<8x128xi32>
    %61 = arith.cmpi slt, %52, %60 : vector<8x128xi32>
    %62 = arith.andi %59, %61 : vector<8x128xi1>
    %63 = arith.select %62, %51, %38 : vector<8x128xi1>, vector<8x128xf32>
    %64 = arith.select %57, %41, %63 : vector<8x128xi1>, vector<8x128xf32>
    %c0_25 = arith.constant 0 : index
    %c0_26 = arith.constant 0 : index
    %65 = vector.load %arg7[%c0_25, %c0_26] : memref<8x128xf32, #tpu.memory_space<vmem>>, vector<8x128xf32>
    tpu.vector_store %arg7[%c0_25, %c0_26], %64 {strides = array<i32>} : memref<8x128xf32, #tpu.memory_space<vmem>>, vector<8x128xf32>,
    return
  }
  func.func @transform_0(%arg0: i32) -> (i32, i32) {
    %c0_i32 = arith.constant 0 : i32
    %c0_i32_0 = arith.constant 0 : i32
    return %arg0, %c0_i32 : i32, i32
  }
  func.func @transform_1(%arg0: i32) -> (i32, i32) {
    %c0_i32 = arith.constant 0 : i32
    %c0_i32_0 = arith.constant 0 : i32
    %c0_i32_1 = arith.constant 0 : i32
    return %c0_i32, %c0_i32_0 : i32, i32
  }
  func.func @transform_2(%arg0: i32) -> (i32, i32) {
    %c0_i32 = arith.constant 0 : i32
    %c0_i32_0 = arith.constant 0 : i32
    %c0_i32_1 = arith.constant 0 : i32
    return %c0_i32, %c0_i32_0 : i32, i32
  }
  func.func @transform_3(%arg0: i32) -> (i32, i32) {
    %c0_i32 = arith.constant 0 : i32
    %c0_i32_0 = arith.constant 0 : i32
    %c0_i32_1 = arith.constant 0 : i32
    return %c0_i32, %c0_i32_0 : i32, i32
  }
  func.func @transform_4(%arg0: i32) -> (i32, i32) {
    %c0_i32 = arith.constant 0 : i32
    %c0_i32_0 = arith.constant 0 : i32
    %c0_i32_1 = arith.constant 0 : i32
    return %c0_i32, %c0_i32_0 : i32, i32
  }
  func.func @transform_5(%arg0: i32) -> (i32, i32) {
    %c0_i32 = arith.constant 0 : i32
    %c0_i32_0 = arith.constant 0 : i32
    %c0_i32_1 = arith.constant 0 : i32
    return %c0_i32, %c0_i32_0 : i32, i32
  }
  func.func @transform_6(%arg0: i32) -> (i32, i32) {
    %c0_i32 = arith.constant 0 : i32
    %c0_i32_0 = arith.constant 0 : i32
    return %arg0, %c0_i32 : i32, i32
  }
}

</mosaic_0001>

<llo_original>
// kernel: actor_critic_forward.1
$region0: #{actor_critic_forward.1}
  #allocation0 [shape = 'u32[]', space=smem, size = 0x4, offset = 0x4, fixed_abs, tag = 'smem constant byte address 0x4 - core index']
  #allocation1 [shape = 'u32[144,128]{1,0:T(1,128)}', space=vmem, size = 0x12000, scoped, tag = 'internal scratch']
  %s0 = inlined_call_operand.vmem [shape: f32[8,128], index: 0, kind: input, shape index: {}]
  %s1 = inlined_call_operand.hbm [shape: bf16[128,256], index: 1, kind: input, shape index: {}]
  %s2 = inlined_call_operand.hbm [shape: bf16[256,128], index: 2, kind: input, shape index: {}]
  %s3 = inlined_call_operand.hbm [shape: bf16[128,256], index: 3, kind: input, shape index: {}]
  %s4 = inlined_call_operand.hbm [shape: bf16[256,128], index: 4, kind: input, shape index: {}]
  %s5 = inlined_call_operand.vmem [shape: f32[3,256], index: 5, kind: input, shape index: {}]
  %s6 = inlined_call_operand.vmem [shape: f32[8,128], index: 6, kind: output, shape index: {}]
  %s7 = sld [smem:[#allocation0]]
  $region50: #{actor_critic_forward.1} parent=0
    _
  %s9 = ssub.s32 1, %s7
  %s10 = scalar_select 0, %s9, %s7
  $region1: #{actor_critic_forward.1} parent=0
    #allocation2 [shape = 'u8[65536]{0}', space=vmem, size = 0x10000, scoped, tag = 'input window, operand 1, single buffered']
    #allocation3 [shape = 's32[1]{0}', space=sflag, size = 0x4, scoped, tag = 'scoped memory for actor_critic_forward.1']
    #allocation4 [shape = 'u8[65536]{0}', space=vmem, size = 0x10000, scoped, tag = 'input window, operand 2, single buffered']
    #allocation5 [shape = 's32[1]{0}', space=sflag, size = 0x4, scoped, tag = 'scoped memory for actor_critic_forward.1']
    #allocation6 [shape = 'u8[65536]{0}', space=vmem, size = 0x10000, scoped, tag = 'input window, operand 3, single buffered']
    #allocation7 [shape = 'u8[65536]{0}', space=vmem, size = 0x10000, scoped, tag = 'input window, operand 4, single buffered']
    #allocation8 [shape = 's32[1]{0}', space=sflag, size = 0x4, scoped, tag = 'scoped memory for actor_critic_forward.1']
    %11 = vsyncpa [#allocation3], 0
    %12 = vsyncpa [#allocation5], 0
    %13 = vsyncpa [#allocation8], 0
    // Predicated region
    $region2: #{actor_critic_forward.1} parent=1 // pred_check
      _
    $region3: #{actor_critic_forward.1} parent=1 // pred_check_branch
      %15 = sbr.rel (0) target = $region5
    $region4: #{actor_critic_forward.1} parent=1 // pred_region
      _
    $region5: #{actor_critic_forward.1} parent=1 // pred_fallthru
      _
    // Predicated region
    $region6: #{actor_critic_forward.1} parent=1 // pred_check
      _
    $region7: #{actor_critic_forward.1} parent=1 // pred_check_branch
      %17 = sbr.rel (0) target = $region9
    $region8: #{actor_critic_forward.1} parent=1 // pred_region
      %s19 = ssub.s32 2048, 2048
      %20 = vsyncadd [#allocation3], %s19
      %s21 = sshll.u32 [#allocation2], 4
      %s22 = int_to_ptr.vmem [resolvable:$true] %s21
      %27 = dma.hbm_to_vmem [thread:$0]  %s1, 2048, %s22, [#allocation3], 128, 128, 8
    $region9: #{actor_critic_forward.1} parent=1 // pred_fallthru
      _
    // Predicated region
    $region10: #{actor_critic_forward.1} parent=1 // pred_check
      _
    $region11: #{actor_critic_forward.1} parent=1 // pred_check_branch
      %29 = sbr.rel (0) target = $region13
    $region12: #{actor_critic_forward.1} parent=1 // pred_region
      %s31 = ssub.s32 2048, 2048
      %32 = vsyncadd [#allocation5], %s31
      %s33 = sshll.u32 [#allocation4], 4
      %s34 = int_to_ptr.vmem [resolvable:$true] %s33
      %39 = dma.hbm_to_vmem [thread:$0]  %s2, 2048, %s34, [#allocation5], 64, 64, 4
    $region13: #{actor_critic_forward.1} parent=1 // pred_fallthru
      _
    // Predicated region
    $region14: #{actor_critic_forward.1} parent=1 // pred_check
      _
    $region15: #{actor_critic_forward.1} parent=1 // pred_check_branch
      %41 = sbr.rel (0) target = $region17
    $region16: #{actor_critic_forward.1} parent=1 // pred_region
      %s43 = ssub.s32 2048, 2048
      %44 = vsyncadd [#allocation5], %s43
      %s45 = sshll.u32 [#allocation6], 4
      %s46 = int_to_ptr.vmem [resolvable:$true] %s45
      %51 = dma.hbm_to_vmem [thread:$0]  %s3, 2048, %s46, [#allocation5], 128, 128, 8
    $region17: #{actor_critic_forward.1} parent=1 // pred_fallthru
      _
    // Predicated region
    $region18: #{actor_critic_forward.1} parent=1 // pred_check
      _
    $region19: #{actor_critic_forward.1} parent=1 // pred_check_branch
      %53 = sbr.rel (0) target = $region21
    $region20: #{actor_critic_forward.1} parent=1 // pred_region
      %s55 = ssub.s32 2048, 2048
      %56 = vsyncadd [#allocation8], %s55
      %s57 = sshll.u32 [#allocation7], 4
      %s58 = int_to_ptr.vmem [resolvable:$true] %s57
      %63 = dma.hbm_to_vmem [thread:$0]  %s4, 2048, %s58, [#allocation8], 64, 64, 4
    $region21: #{actor_critic_forward.1} parent=1 // pred_fallthru
      _
    // Predicated region
    $region22: #{actor_critic_forward.1} parent=1 // pred_check
      _
    $region23: #{actor_critic_forward.1} parent=1 // pred_check_branch
      %65 = sbr.rel (0) target = $region25
    $region24: #{actor_critic_forward.1} parent=1 // pred_region
      _
    $region25: #{actor_critic_forward.1} parent=1 // pred_fallthru
      _
    // Predicated region
    $region26: #{actor_critic_forward.1} parent=1 // pred_check
      _
    $region27: #{actor_critic_forward.1} parent=1 // pred_check_branch
      %67 = sbr.rel (0) target = $region29
    $region28: #{actor_critic_forward.1} parent=1 // pred_region
      %68 = dma.done [#allocation3], 2048
    $region29: #{actor_critic_forward.1} parent=1 // pred_fallthru
      _
    // Predicated region
    $region30: #{actor_critic_forward.1} parent=1 // pred_check
      _
    $region31: #{actor_critic_forward.1} parent=1 // pred_check_branch
      %70 = sbr.rel (0) target = $region33
    $region32: #{actor_critic_forward.1} parent=1 // pred_region
      %71 = dma.done [#allocation5], 2048
    $region33: #{actor_critic_forward.1} parent=1 // pred_fallthru
      _
    // Predicated region
    $region34: #{actor_critic_forward.1} parent=1 // pred_check
      _
    $region35: #{actor_critic_forward.1} parent=1 // pred_check_branch
      %73 = sbr.rel (0) target = $region37
    $region36: #{actor_critic_forward.1} parent=1 // pred_region
      %74 = dma.done [#allocation5], 2048
    $region37: #{actor_critic_forward.1} parent=1 // pred_fallthru
      _
    // Predicated region
    $region38: #{actor_critic_forward.1} parent=1 // pred_check
      _
    $region39: #{actor_critic_forward.1} parent=1 // pred_check_branch
      %76 = sbr.rel (0) target = $region41
    $region40: #{actor_critic_forward.1} parent=1 // pred_region
      %77 = dma.done [#allocation8], 2048
    $region41: #{actor_critic_forward.1} parent=1 // pred_fallthru
      _
    %v79 = vld [vmem:[%s5] ss:$4 sm:$0x3]
    %s80 = scalar_lea.vmem %s5, 1
    %v81 = vld [vmem:[%s80] ss:$4 sm:$0x3]
    %v82 = vld [vmem:[%s5 + $0x2] sm:$0x1]
    %v83 = vld [vmem:[%s5 + $0x6] sm:$0x1]
    %v84 = vld [vmem:[%s0] sm:$0xff]
    %v85 = vpack.c.bf16 %v84, %v84
    %v86 = vld [vmem:[#allocation2] sm:$0xff]
    %v87 = vld [vmem:[#allocation2 + $0x8] sm:$0xff]
    %v88 = vld [vmem:[#allocation2 + $0x10] sm:$0xff]
    %v89 = vld [vmem:[#allocation2 + $0x18] sm:$0xff]
    %v90 = vld [vmem:[#allocation2 + $0x20] sm:$0xff]
    %v91 = vld [vmem:[#allocation2 + $0x28] sm:$0xff]
    %v92 = vld [vmem:[#allocation2 + $0x30] sm:$0xff]
    %v93 = vld [vmem:[#allocation2 + $0x38] sm:$0xff]
    %v94 = vld [vmem:[#allocation2 + $0x40] sm:$0xff]
    %v95 = vld [vmem:[#allocation2 + $0x48] sm:$0xff]
    %v96 = vld [vmem:[#allocation2 + $0x50] sm:$0xff]
    %v97 = vld [vmem:[#allocation2 + $0x58] sm:$0xff]
    %v98 = vld [vmem:[#allocation2 + $0x60] sm:$0xff]
    %v99 = vld [vmem:[#allocation2 + $0x68] sm:$0xff]
    %v100 = vld [vmem:[#allocation2 + $0x70] sm:$0xff]
    %v101 = vld [vmem:[#allocation2 + $0x78] sm:$0xff]
    %v103 = vlaneseq
    %v104 = vshrl.u32 %v103, 7
    %v105 = vsub.s32 0, %v104
    %v106 = vrot.slane %v79, %v105
    %v107 = vlaneseq
    %v108 = vshrl.u32 %v107, 7
    %v109 = vsub.s32 1, %v108
    %v110 = vrot.slane %v79, %v109
    %v129 = vunpack.c.l.b16 %v86
    %v130 = vunpack.c.h.b16 %v86
    %v131 = vunpack.c.l.b16 %v87
    %v132 = vunpack.c.h.b16 %v87
    %v133 = vunpack.c.l.b16 %v88
    %v134 = vunpack.c.h.b16 %v88
    %v135 = vunpack.c.l.b16 %v89
    %v136 = vunpack.c.h.b16 %v89
    %v137 = vunpack.c.l.b16 %v90
    %v138 = vunpack.c.h.b16 %v90
    %v139 = vunpack.c.l.b16 %v91
    %v140 = vunpack.c.h.b16 %v91
    %v141 = vunpack.c.l.b16 %v92
    %v142 = vunpack.c.h.b16 %v92
    %v143 = vunpack.c.l.b16 %v93
    %v144 = vunpack.c.h.b16 %v93
    %v145 = vunpack.c.l.b16 %v94
    %v146 = vunpack.c.h.b16 %v94
    %v147 = vunpack.c.l.b16 %v95
    %v148 = vunpack.c.h.b16 %v95
    %v149 = vunpack.c.l.b16 %v96
    %v150 = vunpack.c.h.b16 %v96
    %v151 = vunpack.c.l.b16 %v97
    %v152 = vunpack.c.h.b16 %v97
    %v153 = vunpack.c.l.b16 %v98
    %v154 = vunpack.c.h.b16 %v98
    %v155 = vunpack.c.l.b16 %v99
    %v156 = vunpack.c.h.b16 %v99
    %v157 = vunpack.c.l.b16 %v100
    %v158 = vunpack.c.h.b16 %v100
    %v159 = vunpack.c.l.b16 %v101
    %v160 = vunpack.c.h.b16 %v101
    %v161 = vpack.c.b16 %v131, %v129
    %v162 = vpack.c.b16 %v132, %v130
    %v163 = vpack.c.b16 %v135, %v133
    %v164 = vpack.c.b16 %v136, %v134
    %v165 = vpack.c.b16 %v139, %v137
    %v166 = vpack.c.b16 %v140, %v138
    %v167 = vpack.c.b16 %v143, %v141
    %v168 = vpack.c.b16 %v144, %v142
    %v169 = vpack.c.b16 %v147, %v145
    %v170 = vpack.c.b16 %v148, %v146
    %v171 = vpack.c.b16 %v151, %v149
    %v172 = vpack.c.b16 %v152, %v150
    %v173 = vpack.c.b16 %v155, %v153
    %v174 = vpack.c.b16 %v156, %v154
    %v175 = vpack.c.b16 %v159, %v157
    %v176 = vpack.c.b16 %v160, %v158
    %193 = vmatprep.subr.bf16.mxu0 %v176
    %194 = vmatpush1.bf16.msra.mxu0 %v175
    %195 = vmatprep.subr.bf16.mxu0 %v174
    %196 = vmatpush1.bf16.msra.mxu0 %v173
    %197 = vmatprep.subr.bf16.mxu0 %v172
    %198 = vmatpush1.bf16.msra.mxu0 %v171
    %199 = vmatprep.subr.bf16.mxu0 %v170
    %200 = vmatpush1.bf16.msra.mxu0 %v169
    %201 = vmatprep.subr.bf16.mxu0 %v168
    %202 = vmatpush1.bf16.msra.mxu0 %v167
    %203 = vmatprep.subr.bf16.mxu0 %v166
    %204 = vmatpush1.bf16.msra.mxu0 %v165
    %205 = vmatprep.subr.bf16.mxu0 %v164
    %206 = vmatpush1.bf16.msra.mxu0 %v163
    %207 = vmatprep.subr.bf16.mxu0 %v162
    %208 = vmatpush1.bf16.msra.mxu0 %v161
    %209 = vmatprep.subr.bf16.mxu0 0
    %210 = vmatpush2.bf16.msra.mxu0 0
    %211 = vmatprep.subr.bf16.mxu0 0
    %212 = vmatpush2.bf16.msra.mxu0 0
    %213 = vmatprep.subr.bf16.mxu0 0
    %214 = vmatpush2.bf16.msra.mxu0 0
    %215 = vmatprep.subr.bf16.mxu0 0
    %216 = vmatpush2.bf16.msra.mxu0 0
    %217 = vmatprep.subr.bf16.mxu0 0
    %218 = vmatpush2.bf16.msra.mxu0 0
    %219 = vmatprep.subr.bf16.mxu0 0
    %220 = vmatpush2.bf16.msra.mxu0 0
    %221 = vmatprep.subr.bf16.mxu0 0
    %222 = vmatpush2.bf16.msra.mxu0 0
    %223 = vmatprep.subr.bf16.mxu0 0
    %224 = vmatpush2.bf16.msra.mxu0 0
    %225 = vmatprep.mubr.bf16.mxu0 0
    %226 = vmatmul.mubr.bf16.gmra.mxu0 %v85
    %v227 = vpop.f32.mrf.mxu0
    %v228 = vadd.f32 %v106, %v227
    %v229 = vpop.f32.mrf.mxu0
    %v230 = vadd.f32 %v110, %v229
    %v231 = vpop.f32.mrf.mxu0
    %v232 = vpop.f32.mrf.mxu0
    %233 = vdwg.mxu0
    %v234 = vmax.f32 %v228, 0.0
    %v235 = vmax.f32 %v230, 0.0
    %v236 = vpack.c.bf16 %v234, %v234
    %v237 = vpack.c.bf16 %v235, %v235
    %v238 = vld [vmem:[#allocation4] sm:$0xf]
    %v239 = vld [vmem:[#allocation4 + $0x4] sm:$0xf]
    %v240 = vld [vmem:[#allocation4 + $0x8] sm:$0xf]
    %v241 = vld [vmem:[#allocation4 + $0xc] sm:$0xf]
    %v242 = vld [vmem:[#allocation4 + $0x10] sm:$0xf]
    %v243 = vld [vmem:[#allocation4 + $0x14] sm:$0xf]
    %v244 = vld [vmem:[#allocation4 + $0x18] sm:$0xf]
    %v245 = vld [vmem:[#allocation4 + $0x1c] sm:$0xf]
    %v246 = vld [vmem:[#allocation4 + $0x20] sm:$0xf]
    %v247 = vld [vmem:[#allocation4 + $0x24] sm:$0xf]
    %v248 = vld [vmem:[#allocation4 + $0x28] sm:$0xf]
    %v249 = vld [vmem:[#allocation4 + $0x2c] sm:$0xf]
    %v250 = vld [vmem:[#allocation4 + $0x30] sm:$0xf]
    %v251 = vld [vmem:[#allocation4 + $0x34] sm:$0xf]
    %v252 = vld [vmem:[#allocation4 + $0x38] sm:$0xf]
    %v253 = vld [vmem:[#allocation4 + $0x3c] sm:$0xf]
    %v254 = vld [vmem:[#allocation4 + $0x40] sm:$0xf]
    %v255 = vld [vmem:[#allocation4 + $0x44] sm:$0xf]
    %v256 = vld [vmem:[#allocation4 + $0x48] sm:$0xf]
    %v257 = vld [vmem:[#allocation4 + $0x4c] sm:$0xf]
    %v258 = vld [vmem:[#allocation4 + $0x50] sm:$0xf]
    %v259 = vld [vmem:[#allocation4 + $0x54] sm:$0xf]
    %v260 = vld [vmem:[#allocation4 + $0x58] sm:$0xf]
    %v261 = vld [vmem:[#allocation4 + $0x5c] sm:$0xf]
    %v262 = vld [vmem:[#allocation4 + $0x60] sm:$0xf]
    %v263 = vld [vmem:[#allocation4 + $0x64] sm:$0xf]
    %v264 = vld [vmem:[#allocation4 + $0x68] sm:$0xf]
    %v265 = vld [vmem:[#allocation4 + $0x6c] sm:$0xf]
    %v266 = vld [vmem:[#allocation4 + $0x70] sm:$0xf]
    %v267 = vld [vmem:[#allocation4 + $0x74] sm:$0xf]
    %v268 = vld [vmem:[#allocation4 + $0x78] sm:$0xf]
    %v269 = vld [vmem:[#allocation4 + $0x7c] sm:$0xf]
    %v270 = vlaneseq
    %v271 = vshrl.u32 %v270, 7
    %v272 = vsub.s32 0, %v271
    %v273 = vrot.slane %v82, %v272
    %v306 = vunpack.c.l.b16 %v238
    %v307 = vunpack.c.l.b16 %v239
    %v308 = vunpack.c.l.b16 %v240
    %v309 = vunpack.c.l.b16 %v241
    %v310 = vunpack.c.l.b16 %v242
    %v311 = vunpack.c.l.b16 %v243
    %v312 = vunpack.c.l.b16 %v244
    %v313 = vunpack.c.l.b16 %v245
    %v314 = vunpack.c.l.b16 %v246
    %v315 = vunpack.c.l.b16 %v247
    %v316 = vunpack.c.l.b16 %v248
    %v317 = vunpack.c.l.b16 %v249
    %v318 = vunpack.c.l.b16 %v250
    %v319 = vunpack.c.l.b16 %v251
    %v320 = vunpack.c.l.b16 %v252
    %v321 = vunpack.c.l.b16 %v253
    %v322 = vunpack.c.l.b16 %v254
    %v323 = vunpack.c.l.b16 %v255
    %v324 = vunpack.c.l.b16 %v256
    %v325 = vunpack.c.l.b16 %v257
    %v326 = vunpack.c.l.b16 %v258
    %v327 = vunpack.c.l.b16 %v259
    %v328 = vunpack.c.l.b16 %v260
    %v329 = vunpack.c.l.b16 %v261
    %v330 = vunpack.c.l.b16 %v262
    %v331 = vunpack.c.l.b16 %v263
    %v332 = vunpack.c.l.b16 %v264
    %v333 = vunpack.c.l.b16 %v265
    %v334 = vunpack.c.l.b16 %v266
    %v335 = vunpack.c.l.b16 %v267
    %v336 = vunpack.c.l.b16 %v268
    %v337 = vunpack.c.l.b16 %v269
    %v338 = vpack.c.b16 %v307, %v306
    %v339 = vpack.c.b16 %v309, %v308
    %v340 = vpack.c.b16 %v311, %v310
    %v341 = vpack.c.b16 %v313, %v312
    %v342 = vpack.c.b16 %v315, %v314
    %v343 = vpack.c.b16 %v317, %v316
    %v344 = vpack.c.b16 %v319, %v318
    %v345 = vpack.c.b16 %v321, %v320
    %v346 = vpack.c.b16 %v323, %v322
    %v347 = vpack.c.b16 %v325, %v324
    %v348 = vpack.c.b16 %v327, %v326
    %v349 = vpack.c.b16 %v329, %v328
    %v350 = vpack.c.b16 %v331, %v330
    %v351 = vpack.c.b16 %v333, %v332
    %v352 = vpack.c.b16 %v335, %v334
    %v353 = vpack.c.b16 %v337, %v336
    %370 = vmatprep.subr.bf16.mxu0 0
    %371 = vmatpush1.bf16.msra.mxu0 %v345
    %372 = vmatprep.subr.bf16.mxu0 0
    %373 = vmatpush1.bf16.msra.mxu0 %v344
    %374 = vmatprep.subr.bf16.mxu0 0
    %375 = vmatpush1.bf16.msra.mxu0 %v343
    %376 = vmatprep.subr.bf16.mxu0 0
    %377 = vmatpush1.bf16.msra.mxu0 %v342
    %378 = vmatprep.subr.bf16.mxu0 0
    %379 = vmatpush1.bf16.msra.mxu0 %v341
    %380 = vmatprep.subr.bf16.mxu0 0
    %381 = vmatpush1.bf16.msra.mxu0 %v340
    %382 = vmatprep.subr.bf16.mxu0 0
    %383 = vmatpush1.bf16.msra.mxu0 %v339
    %384 = vmatprep.subr.bf16.mxu0 0
    %385 = vmatpush1.bf16.msra.mxu0 %v338
    %386 = vmatprep.subr.bf16.mxu0 0
    %387 = vmatpush2.bf16.msra.mxu0 %v353
    %388 = vmatprep.subr.bf16.mxu0 0
    %389 = vmatpush2.bf16.msra.mxu0 %v352
    %390 = vmatprep.subr.bf16.mxu0 0
    %391 = vmatpush2.bf16.msra.mxu0 %v351
    %392 = vmatprep.subr.bf16.mxu0 0
    %393 = vmatpush2.bf16.msra.mxu0 %v350
    %394 = vmatprep.subr.bf16.mxu0 0
    %395 = vmatpush2.bf16.msra.mxu0 %v349
    %396 = vmatprep.subr.bf16.mxu0 0
    %397 = vmatpush2.bf16.msra.mxu0 %v348
    %398 = vmatprep.subr.bf16.mxu0 0
    %399 = vmatpush2.bf16.msra.mxu0 %v347
    %400 = vmatprep.subr.bf16.mxu0 0
    %401 = vmatpush2.bf16.msra.mxu0 %v346
    %402 = vmatprep.mubr.bf16.mxu0 %v237
    %403 = vmatmul.mubr.bf16.gmra.mxu0 %v236
    %v404 = vpop.f32.mrf.mxu0
    %v405 = vadd.f32 %v273, %v404
    %v406 = vpop.f32.mrf.mxu0
    %v407 = vpop.f32.mrf.mxu0
    %v408 = vpop.f32.mrf.mxu0
    %409 = vdwg.mxu0
    %v410 = vmax.f32 %v405, 0.0
    %v411 = vpack.c.bf16 %v410, %v410
    %v412 = vld [vmem:[#allocation6] sm:$0xff]
    %v413 = vld [vmem:[#allocation6 + $0x8] sm:$0xff]
    %v414 = vld [vmem:[#allocation6 + $0x10] sm:$0xff]
    %v415 = vld [vmem:[#allocation6 + $0x18] sm:$0xff]
    %v416 = vld [vmem:[#allocation6 + $0x20] sm:$0xff]
    %v417 = vld [vmem:[#allocation6 + $0x28] sm:$0xff]
    %v418 = vld [vmem:[#allocation6 + $0x30] sm:$0xff]
    %v419 = vld [vmem:[#allocation6 + $0x38] sm:$0xff]
    %v420 = vld [vmem:[#allocation6 + $0x40] sm:$0xff]
    %v421 = vld [vmem:[#allocation6 + $0x48] sm:$0xff]
    %v422 = vld [vmem:[#allocation6 + $0x50] sm:$0xff]
    %v423 = vld [vmem:[#allocation6 + $0x58] sm:$0xff]
    %v424 = vld [vmem:[#allocation6 + $0x60] sm:$0xff]
    %v425 = vld [vmem:[#allocation6 + $0x68] sm:$0xff]
    %v426 = vld [vmem:[#allocation6 + $0x70] sm:$0xff]
    %v427 = vld [vmem:[#allocation6 + $0x78] sm:$0xff]
    %v429 = vlaneseq
    %v430 = vshrl.u32 %v429, 7
    %v431 = vsub.s32 0, %v430
    %v432 = vrot.slane %v81, %v431
    %v433 = vlaneseq
    %v434 = vshrl.u32 %v433, 7
    %v435 = vsub.s32 1, %v434
    %v436 = vrot.slane %v81, %v435
    %v455 = vunpack.c.l.b16 %v412
    %v456 = vunpack.c.h.b16 %v412
    %v457 = vunpack.c.l.b16 %v413
    %v458 = vunpack.c.h.b16 %v413
    %v459 = vunpack.c.l.b16 %v414
    %v460 = vunpack.c.h.b16 %v414
    %v461 = vunpack.c.l.b16 %v415
    %v462 = vunpack.c.h.b16 %v415
    %v463 = vunpack.c.l.b16 %v416
    %v464 = vunpack.c.h.b16 %v416
    %v465 = vunpack.c.l.b16 %v417
    %v466 = vunpack.c.h.b16 %v417
    %v467 = vunpack.c.l.b16 %v418
    %v468 = vunpack.c.h.b16 %v418
    %v469 = vunpack.c.l.b16 %v419
    %v470 = vunpack.c.h.b16 %v419
    %v471 = vunpack.c.l.b16 %v420
    %v472 = vunpack.c.h.b16 %v420
    %v473 = vunpack.c.l.b16 %v421
    %v474 = vunpack.c.h.b16 %v421
    %v475 = vunpack.c.l.b16 %v422
    %v476 = vunpack.c.h.b16 %v422
    %v477 = vunpack.c.l.b16 %v423
    %v478 = vunpack.c.h.b16 %v423
    %v479 = vunpack.c.l.b16 %v424
    %v480 = vunpack.c.h.b16 %v424
    %v481 = vunpack.c.l.b16 %v425
    %v482 = vunpack.c.h.b16 %v425
    %v483 = vunpack.c.l.b16 %v426
    %v484 = vunpack.c.h.b16 %v426
    %v485 = vunpack.c.l.b16 %v427
    %v486 = vunpack.c.h.b16 %v427
    %v487 = vpack.c.b16 %v457, %v455
    %v488 = vpack.c.b16 %v458, %v456
    %v489 = vpack.c.b16 %v461, %v459
    %v490 = vpack.c.b16 %v462, %v460
    %v491 = vpack.c.b16 %v465, %v463
    %v492 = vpack.c.b16 %v466, %v464
    %v493 = vpack.c.b16 %v469, %v467
    %v494 = vpack.c.b16 %v470, %v468
    %v495 = vpack.c.b16 %v473, %v471
    %v496 = vpack.c.b16 %v474, %v472
    %v497 = vpack.c.b16 %v477, %v475
    %v498 = vpack.c.b16 %v478, %v476
    %v499 = vpack.c.b16 %v481, %v479
    %v500 = vpack.c.b16 %v482, %v480
    %v501 = vpack.c.b16 %v485, %v483
    %v502 = vpack.c.b16 %v486, %v484
    %519 = vmatprep.subr.bf16.mxu0 %v502
    %520 = vmatpush1.bf16.msra.mxu0 %v501
    %521 = vmatprep.subr.bf16.mxu0 %v500
    %522 = vmatpush1.bf16.msra.mxu0 %v499
    %523 = vmatprep.subr.bf16.mxu0 %v498
    %524 = vmatpush1.bf16.msra.mxu0 %v497
    %525 = vmatprep.subr.bf16.mxu0 %v496
    %526 = vmatpush1.bf16.msra.mxu0 %v495
    %527 = vmatprep.subr.bf16.mxu0 %v494
    %528 = vmatpush1.bf16.msra.mxu0 %v493
    %529 = vmatprep.subr.bf16.mxu0 %v492
    %530 = vmatpush1.bf16.msra.mxu0 %v491
    %531 = vmatprep.subr.bf16.mxu0 %v490
    %532 = vmatpush1.bf16.msra.mxu0 %v489
    %533 = vmatprep.subr.bf16.mxu0 %v488
    %534 = vmatpush1.bf16.msra.mxu0 %v487
    %535 = vmatprep.subr.bf16.mxu0 0
    %536 = vmatpush2.bf16.msra.mxu0 0
    %537 = vmatprep.subr.bf16.mxu0 0
    %538 = vmatpush2.bf16.msra.mxu0 0
    %539 = vmatprep.subr.bf16.mxu0 0
    %540 = vmatpush2.bf16.msra.mxu0 0
    %541 = vmatprep.subr.bf16.mxu0 0
    %542 = vmatpush2.bf16.msra.mxu0 0
    %543 = vmatprep.subr.bf16.mxu0 0
    %544 = vmatpush2.bf16.msra.mxu0 0
    %545 = vmatprep.subr.bf16.mxu0 0
    %546 = vmatpush2.bf16.msra.mxu0 0
    %547 = vmatprep.subr.bf16.mxu0 0
    %548 = vmatpush2.bf16.msra.mxu0 0
    %549 = vmatprep.subr.bf16.mxu0 0
    %550 = vmatpush2.bf16.msra.mxu0 0
    %551 = vmatprep.mubr.bf16.mxu0 0
    %552 = vmatmul.mubr.bf16.gmra.mxu0 %v411
    %v553 = vpop.f32.mrf.mxu0
    %v554 = vadd.f32 %v432, %v553
    %v555 = vpop.f32.mrf.mxu0
    %v556 = vadd.f32 %v436, %v555
    %v557 = vpop.f32.mrf.mxu0
    %v558 = vpop.f32.mrf.mxu0
    %559 = vdwg.mxu0
    %v560 = vmax.f32 %v554, 0.0
    %v561 = vmax.f32 %v556, 0.0
    %v562 = vpack.c.bf16 %v560, %v560
    %v563 = vpack.c.bf16 %v561, %v561
    %v564 = vld [vmem:[#allocation7] sm:$0xf]
    %v565 = vld [vmem:[#allocation7 + $0x4] sm:$0xf]
    %v566 = vld [vmem:[#allocation7 + $0x8] sm:$0xf]
    %v567 = vld [vmem:[#allocation7 + $0xc] sm:$0xf]
    %v568 = vld [vmem:[#allocation7 + $0x10] sm:$0xf]
    %v569 = vld [vmem:[#allocation7 + $0x14] sm:$0xf]
    %v570 = vld [vmem:[#allocation7 + $0x18] sm:$0xf]
    %v571 = vld [vmem:[#allocation7 + $0x1c] sm:$0xf]
    %v572 = vld [vmem:[#allocation7 + $0x20] sm:$0xf]
    %v573 = vld [vmem:[#allocation7 + $0x24] sm:$0xf]
    %v574 = vld [vmem:[#allocation7 + $0x28] sm:$0xf]
    %v575 = vld [vmem:[#allocation7 + $0x2c] sm:$0xf]
    %v576 = vld [vmem:[#allocation7 + $0x30] sm:$0xf]
    %v577 = vld [vmem:[#allocation7 + $0x34] sm:$0xf]
    %v578 = vld [vmem:[#allocation7 + $0x38] sm:$0xf]
    %v579 = vld [vmem:[#allocation7 + $0x3c] sm:$0xf]
    %v580 = vld [vmem:[#allocation7 + $0x40] sm:$0xf]
    %v581 = vld [vmem:[#allocation7 + $0x44] sm:$0xf]
    %v582 = vld [vmem:[#allocation7 + $0x48] sm:$0xf]
    %v583 = vld [vmem:[#allocation7 + $0x4c] sm:$0xf]
    %v584 = vld [vmem:[#allocation7 + $0x50] sm:$0xf]
    %v585 = vld [vmem:[#allocation7 + $0x54] sm:$0xf]
    %v586 = vld [vmem:[#allocation7 + $0x58] sm:$0xf]
    %v587 = vld [vmem:[#allocation7 + $0x5c] sm:$0xf]
    %v588 = vld [vmem:[#allocation7 + $0x60] sm:$0xf]
    %v589 = vld [vmem:[#allocation7 + $0x64] sm:$0xf]
    %v590 = vld [vmem:[#allocation7 + $0x68] sm:$0xf]
    %v591 = vld [vmem:[#allocation7 + $0x6c] sm:$0xf]
    %v592 = vld [vmem:[#allocation7 + $0x70] sm:$0xf]
    %v593 = vld [vmem:[#allocation7 + $0x74] sm:$0xf]
    %v594 = vld [vmem:[#allocation7 + $0x78] sm:$0xf]
    %v595 = vld [vmem:[#allocation7 + $0x7c] sm:$0xf]
    %v596 = vlaneseq
    %v597 = vshrl.u32 %v596, 7
    %v598 = vsub.s32 0, %v597
    %v599 = vrot.slane %v83, %v598
    %v632 = vunpack.c.l.b16 %v564
    %v633 = vunpack.c.l.b16 %v565
    %v634 = vunpack.c.l.b16 %v566
    %v635 = vunpack.c.l.b16 %v567
    %v636 = vunpack.c.l.b16 %v568
    %v637 = vunpack.c.l.b16 %v569
    %v638 = vunpack.c.l.b16 %v570
    %v639 = vunpack.c.l.b16 %v571
    %v640 = vunpack.c.l.b16 %v572
    %v641 = vunpack.c.l.b16 %v573
    %v642 = vunpack.c.l.b16 %v574
    %v643 = vunpack.c.l.b16 %v575
    %v644 = vunpack.c.l.b16 %v576
    %v645 = vunpack.c.l.b16 %v577
    %v646 = vunpack.c.l.b16 %v578
    %v647 = vunpack.c.l.b16 %v579
    %v648 = vunpack.c.l.b16 %v580
    %v649 = vunpack.c.l.b16 %v581
    %v650 = vunpack.c.l.b16 %v582
    %v651 = vunpack.c.l.b16 %v583
    %v652 = vunpack.c.l.b16 %v584
    %v653 = vunpack.c.l.b16 %v585
    %v654 = vunpack.c.l.b16 %v586
    %v655 = vunpack.c.l.b16 %v587
    %v656 = vunpack.c.l.b16 %v588
    %v657 = vunpack.c.l.b16 %v589
    %v658 = vunpack.c.l.b16 %v590
    %v659 = vunpack.c.l.b16 %v591
    %v660 = vunpack.c.l.b16 %v592
    %v661 = vunpack.c.l.b16 %v593
    %v662 = vunpack.c.l.b16 %v594
    %v663 = vunpack.c.l.b16 %v595
    %v664 = vpack.c.b16 %v633, %v632
    %v665 = vpack.c.b16 %v635, %v634
    %v666 = vpack.c.b16 %v637, %v636
    %v667 = vpack.c.b16 %v639, %v638
    %v668 = vpack.c.b16 %v641, %v640
    %v669 = vpack.c.b16 %v643, %v642
    %v670 = vpack.c.b16 %v645, %v644
    %v671 = vpack.c.b16 %v647, %v646
    %v672 = vpack.c.b16 %v649, %v648
    %v673 = vpack.c.b16 %v651, %v650
    %v674 = vpack.c.b16 %v653, %v652
    %v675 = vpack.c.b16 %v655, %v654
    %v676 = vpack.c.b16 %v657, %v656
    %v677 = vpack.c.b16 %v659, %v658
    %v678 = vpack.c.b16 %v661, %v660
    %v679 = vpack.c.b16 %v663, %v662
    %696 = vmatprep.subr.bf16.mxu0 0
    %697 = vmatpush1.bf16.msra.mxu0 %v671
    %698 = vmatprep.subr.bf16.mxu0 0
    %699 = vmatpush1.bf16.msra.mxu0 %v670
    %700 = vmatprep.subr.bf16.mxu0 0
    %701 = vmatpush1.bf16.msra.mxu0 %v669
    %702 = vmatprep.subr.bf16.mxu0 0
    %703 = vmatpush1.bf16.msra.mxu0 %v668
    %704 = vmatprep.subr.bf16.mxu0 0
    %705 = vmatpush1.bf16.msra.mxu0 %v667
    %706 = vmatprep.subr.bf16.mxu0 0
    %707 = vmatpush1.bf16.msra.mxu0 %v666
    %708 = vmatprep.subr.bf16.mxu0 0
    %709 = vmatpush1.bf16.msra.mxu0 %v665
    %710 = vmatprep.subr.bf16.mxu0 0
    %711 = vmatpush1.bf16.msra.mxu0 %v664
    %712 = vmatprep.subr.bf16.mxu0 0
    %713 = vmatpush2.bf16.msra.mxu0 %v679
    %714 = vmatprep.subr.bf16.mxu0 0
    %715 = vmatpush2.bf16.msra.mxu0 %v678
    %716 = vmatprep.subr.bf16.mxu0 0
    %717 = vmatpush2.bf16.msra.mxu0 %v677
    %718 = vmatprep.subr.bf16.mxu0 0
    %719 = vmatpush2.bf16.msra.mxu0 %v676
    %720 = vmatprep.subr.bf16.mxu0 0
    %721 = vmatpush2.bf16.msra.mxu0 %v675
    %722 = vmatprep.subr.bf16.mxu0 0
    %723 = vmatpush2.bf16.msra.mxu0 %v674
    %724 = vmatprep.subr.bf16.mxu0 0
    %725 = vmatpush2.bf16.msra.mxu0 %v673
    %726 = vmatprep.subr.bf16.mxu0 0
    %727 = vmatpush2.bf16.msra.mxu0 %v672
    %728 = vmatprep.mubr.bf16.mxu0 %v563
    %729 = vmatmul.mubr.bf16.gmra.mxu0 %v562
    %v730 = vpop.f32.mrf.mxu0
    %v731 = vadd.f32 %v599, %v730
    %v732 = vpop.f32.mrf.mxu0
    %v733 = vpop.f32.mrf.mxu0
    %v734 = vpop.f32.mrf.mxu0
    %735 = vdwg.mxu0
    %v736 = vtanh.pop %v731
    %v737 = vmul.f32 %v736, 180.0
    %v738 = vmax.f32 %v731, 0.0
    %v739 = vand.u32 2147483647, %v731
    %v740 = vsub.f32 0.0, %v739
    %v741 = vmul.f32 %v740, 1.442695
    %v742 = vpow.pop %v741
    %v743 = vadd.f32 %v742, 1.0
    %v744 = vlog2.pop %v743
    %v745 = vmul.f32 %v744, 0.6931472
    %v746 = vmul.f32 -0.5, %v742
    %v747 = vadd.f32 %v746, 1.0
    %v748 = vmul.f32 %v747, %v742
    %v749 = vand.u32 2147483647, %v742
    %vm750 = vcmp.lt.f32.partialorder %v749, 0.0004427343
    %v751 = vsel %vm750, %v748, %v745
    %v752 = vadd.f32 %v738, %v751
    %v753 = vadd.f32 %v752, 0.1
    %v754 = vlaneseq
    %v755 = vand.u32 %v754, 127
    %vm756 = vcmp.ge.s32.totalorder %v755, 2
    %vm757 = vcmp.lt.s32.totalorder %v755, 6
    %vm758 = vmand %vm756, %vm757
    %vm759 = vcmp.ge.s32.totalorder %v755, 6
    %vm760 = vcmp.lt.s32.totalorder %v755, 10
    %vm761 = vmand %vm759, %vm760
    %v762 = vsel %vm761, %v753, %v731
    %v763 = vsel %vm758, %v737, %v762
    %764 = vst [vmem:[%s6] sm:$0xff] %v763
    // Predicated region
    $region42: #{actor_critic_forward.1} parent=1 // pred_check
      _
    $region43: #{actor_critic_forward.1} parent=1 // pred_check_branch
      %766 = sbr.rel (0) target = $region45
    $region44: #{actor_critic_forward.1} parent=1 // pred_region
      _
    $region45: #{actor_critic_forward.1} parent=1 // pred_fallthru
      _
    // Predicated region
    $region46: #{actor_critic_forward.1} parent=1 // pred_check
      _
    $region47: #{actor_critic_forward.1} parent=1 // pred_check_branch
      %768 = sbr.rel (0) target = $region49
    $region48: #{actor_critic_forward.1} parent=1 // pred_region
      _
    $region49: #{actor_critic_forward.1} parent=1 // pred_fallthru
      _
    %769 = vsyncpa [#allocation3], 1
    %770 = vsyncpa [#allocation5], 1
    %771 = vsyncpa [#allocation8], 1

</llo_original>
